<compile_context>
chip_gen: v5e
topology: v5e:2x2
jax: 0.10.0
libtpu: 0.0.40
codegen_flags: <defaults>
</compile_context>

<pallas_src>
import jax
import jax.numpy as jnp
from jax import lax
from jax.experimental import pallas as pl
from jax.experimental.pallas import tpu as pltpu

_EPS = 1e-5


def _vmem_budget_bytes():
    """Generation-aware VMEM budget (v7x has 64 MiB total; v5e/v6e have 128 MiB)."""
    cap = 64 * 1024 * 1024
    try:
        info = pltpu.get_tpu_info()
        cap = int(getattr(info, "vmem_capacity_bytes", cap))
    except Exception:
        pass
    # Leave headroom for compiler-internal scratch and pipelining slack.
    return min((cap * 3) // 4, 96 * 1024 * 1024)


def _pick_dout_tile(dout, din, budget):
    """Tile Dout only when it is a multiple of 128 (lane width); otherwise whole dim."""
    if dout % 128 != 0:
        return dout  # must take the "equals the full array dim" escape of the (8,128) rule
    # Largest multiple of 128 that divides Dout, <= 512, whose bf16 weight tile
    # (double-buffered by the pipeline even with a constant index_map) fits comfortably.
    for tn in range(min(dout, 512), 127, -128):
        if dout % tn == 0 and 2 * din * tn * 2 <= budget // 3:
            return tn
    return 128


def _pick_batch_tile(b, n, din, tn, budget):
    """Batch tile for the fused kernel: biggest bt with <= ~512 rows that fits VMEM."""
    target_rows = 512
    while True:
        bt = max(1, min(b, target_rows // max(n, 1)))
        rows = bt * n
        est = (
            2 * bt * n * n * 4        # A tile (double-buffered)
            + 2 * bt * n * din * 4    # x tile
            + 2 * din * tn * 2        # bf16 weight tile
            + 2 * rows * tn * 4       # y tile
            + rows * din * 6          # f32 + bf16 h intermediate (compiler-managed VMEM)
            + 4 * 2 * tn * 4          # stat accumulators
        )
        if est <= budget or target_rows <= 8:
            return bt
        target_rows //= 2


def _pick_stage3_batch_tile(b_pad, bt, n, dout, budget, max_rows=2048):
    """Stage-3 (normalize) tile: large row slabs, multiple of bt, within VMEM budget."""
    k = b_pad // bt
    best = bt
    for d in range(1, k + 1):
        if k % d == 0:
            cand = bt * d
            fits = 4 * cand * n * dout * 4 <= budget  # y tile + out tile, double-buffered
            if cand * n <= max_rows and fits:
                best = cand
    return best


def fused_ax_linear_stats_kernel(a_ref, x_ref, wt_ref, y_ref, ysum_ref, ysq_ref):
    # a_ref:(bt,N,N) f32, x_ref:(bt,N,Din) f32, wt_ref:(Din,tn) bf16 (pre-transposed W)
    # y_ref:(bt,N,tn) f32; ysum/ysq:(1,tn) f32 accumulators resident across the
    # batch-tile ("arbitrary") grid axis.
    @pl.when(pl.program_id(1) == 0)
    def _():
        ysum_ref[...] = jnp.zeros_like(ysum_ref)
        ysq_ref[...] = jnp.zeros_like(ysq_ref)

    a = a_ref[...]
    x = x_ref[...]
    bt, n, din = x.shape

    if n < 128:
        # VPU path: batched A@x with tiny N gives M=K=N MXU passes (<1% utilization).
        # Do N broadcast-FMAs over (bt, N, Din) vregs instead and keep the MXU free
        # for the big Linear below.
        h = a[:, :, 0:1] * x[:, 0:1, :]
        for j in range(1, n):
            h = h + a[:, :, j:j + 1] * x[:, j:j + 1, :]
    else:
        # Large N: the MXU path is worthwhile; bf16 operands, f32 accumulation.
        h = jnp.einsum(
            "bij,bjd->bid",
            a.astype(jnp.bfloat16),
            x.astype(jnp.bfloat16),
            preferred_element_type=jnp.float32,
        )

    # One big MXU matmul with M = bt*N rows; bf16 operands, f32 accumulation.
    h2 = h.reshape(bt * n, din).astype(jnp.bfloat16)
    y = jnp.dot(h2, wt_ref[...], preferred_element_type=jnp.float32)

    y_ref[...] = y.reshape(y_ref.shape)
    ysum_ref[...] += jnp.sum(y, axis=0, keepdims=True)
    ysq_ref[...] += jnp.sum(y * y, axis=0, keepdims=True)


def bn_apply_kernel(y_ref, scale_ref, shift_ref, o_ref):
    # Pure FMA: y * scale + shift, HBM-bandwidth bound.
    o_ref[...] = (y_ref[...] * scale_ref[...] + shift_ref[...]).astype(o_ref.dtype)


def gconv_forward(x, A, W, bias, gamma, beta):
    # `bias` is accepted but unused: training-mode BatchNorm subtracts the per-channel
    # mean, so a per-channel Linear bias cancels exactly on the output.
    # TODO(synk): add the bias back if this path is reused with use_bn=False or
    #             eval-mode BN (running statistics).
    del bias

    B, N, Din = x.shape
    Dout = W.shape[0]
    R = B * N
    out_dtype = x.dtype

    budget = _vmem_budget_bytes()
    tn = _pick_dout_tile(Dout, Din, budget)
    bt = _pick_batch_tile(B, N, Din, tn, budget)

    # Pad the batch up to a multiple of the batch tile.  Zero-padded batches give
    # y == 0 rows that add nothing to sum / sum-of-squares, and the mean divides by
    # the true row count, so the BN statistics stay exact.
    n_bt = pl.cdiv(B, bt)
    B_pad = n_bt * bt
    if B_pad != B:
        A_p = jnp.pad(A, ((0, B_pad - B), (0, 0), (0, 0)))
        x_p = jnp.pad(x, ((0, B_pad - B), (0, 0), (0, 0)))
    else:
        A_p, x_p = A, x

    # Pre-transpose + pre-cast the weight for the MXU (bf16 operands, f32 accumulate).
    # TODO(synk): hoist this one-time layout prep to parameter setup in a real model so
    #             the weight is not re-laid-out on every forward call.
    wt = W.T.astype(jnp.bfloat16)

    n_dout = Dout // tn

    # ---- fused stage: y = (A @ x) @ W^T plus per-channel sum / sum-of-squares --------
    # The h = A@x intermediate never touches HBM.  Dout-tile axis: "parallel"
    # (megacore); batch-tile axis: "arbitrary" (carries the stat accumulators).
    y, ysum, ysq = pl.pallas_call(
        fused_ax_linear_stats_kernel,
        out_shape=(
            jax.ShapeDtypeStruct((B_pad, N, Dout), jnp.float32),
            jax.ShapeDtypeStruct((1, Dout), jnp.float32),
            jax.ShapeDtypeStruct((1, Dout), jnp.float32),
        ),
        grid=(n_dout, n_bt),
        in_specs=[
            pl.BlockSpec((bt, N, N), lambda j, i: (i, 0, 0)),
            pl.BlockSpec((bt, N, Din), lambda j, i: (i, 0, 0)),
            pl.BlockSpec((Din, tn), lambda j, i: (0, j)),
        ],
        out_specs=(
            pl.BlockSpec((bt, N, tn), lambda j, i: (i, 0, j)),
            pl.BlockSpec((1, tn), lambda j, i: (0, j)),
            pl.BlockSpec((1, tn), lambda j, i: (0, j)),
        ),
        compiler_params=pltpu.CompilerParams(
            dimension_semantics=("parallel", "arbitrary"),
            vmem_limit_bytes=budget,
        ),
    )(A_p, x_p, wt)

    # ---- per-channel scale/shift: tiny (1, Dout) math, keep in plain JAX -------------
    inv_count = 1.0 / R
    mean = ysum * inv_count
    var = jnp.maximum(ysq * inv_count - mean * mean, 0.0)  # clamp: never negative
    # TODO(synk): for very large R a shifted / Welford-style accumulation avoids the
    #             E[y^2] - E[y]^2 cancellation; f32 sum/sumsq is fine at these scales.
    inv = lax.rsqrt(var + _EPS)
    scale2 = gamma.reshape(1, Dout) * inv
    shift2 = beta.reshape(1, Dout) - mean * scale2
    scale = scale2.reshape(1, 1, Dout)
    shift = shift2.reshape(1, 1, Dout)
    # TODO(synk): PyTorch BatchNorm1d (training) also updates running_mean/running_var
    #             (unbiased variance, R/(R-1)); derive and return them from mean/var if
    #             state parity with the PyTorch module is required.

    # ---- normalize stage: pure FMA over large row tiles, written in place ------------
    bt3 = _pick_stage3_batch_tile(B_pad, bt, N, Dout, budget)
    aliases = {0: 0} if out_dtype == jnp.float32 else {}
    out = pl.pallas_call(
        bn_apply_kernel,
        out_shape=jax.ShapeDtypeStruct((B_pad, N, Dout), out_dtype),
        grid=(B_pad // bt3,),
        in_specs=[
            pl.BlockSpec((bt3, N, Dout), lambda i: (i, 0, 0)),
            pl.BlockSpec((1, 1, Dout), lambda i: (0, 0, 0)),
            pl.BlockSpec((1, 1, Dout), lambda i: (0, 0, 0)),
        ],
        out_specs=pl.BlockSpec((bt3, N, Dout), lambda i: (i, 0, 0)),
        input_output_aliases=aliases,
        compiler_params=pltpu.CompilerParams(
            dimension_semantics=("parallel",), vmem_limit_bytes=budget
        ),
    )(y, scale, shift)

    return out[:B]


if __name__ == "__main__":
    B, N, Din, Dout = 2, 8, 16, 32

    key = jax.random.PRNGKey(0)
    kx, ka, kw, kb = jax.random.split(key, 4)

    x = jax.random.normal(kx, (B, N, Din), dtype=jnp.float32)
    A = jax.random.normal(ka, (B, N, N), dtype=jnp.float32)

    bound = 1.0 / (Din ** 0.5)
    W = jax.random.uniform(kw, (Dout, Din), minval=-bound, maxval=bound, dtype=jnp.float32)
    bias = jax.random.uniform(kb, (Dout,), minval=-bound, maxval=bound, dtype=jnp.float32)
    gamma = jnp.ones((Dout,), dtype=jnp.float32)
    beta = jnp.zeros((Dout,), dtype=jnp.float32)

    fwd = jax.jit(gconv_forward)
    out = fwd(x, A, W, bias, gamma, beta)
    jax.block_until_ready(out)

    # Reference in plain JAX (training-mode BN; bias included here and absorbed by BN).
    ref = jnp.einsum("bij,bjd->bid", A, x, precision="highest")
    ref = jnp.einsum("bid,od->bio", ref, W, precision="highest") + bias
    rf = ref.reshape(B * N, Dout)
    m = rf.mean(axis=0, keepdims=True)
    v = ((rf - m) ** 2).mean(axis=0, keepdims=True)
    rf = (rf - m) * lax.rsqrt(v + 1e-5) * gamma + beta
    ref = rf.reshape(B, N, Dout)

    assert out.shape == (B, N, Dout)
    # Tolerance accounts for bf16 MXU operands (f32 accumulation / f32 BN statistics).
    assert jnp.allclose(out, ref, atol=2e-2, rtol=2e-2), "mismatch vs reference"

    print("KERNEL_OK")
</pallas_src>

<mosaic_0001>
module attributes {stable_mosaic.version = 11 : i64} {
  func.func @bn_apply_kernel(%arg0: i32, %arg1: memref<2x8x32xf32, #tpu.memory_space<vmem>>, %arg2: memref<1x1x32xf32, #tpu.memory_space<vmem>>, %arg3: memref<1x1x32xf32, #tpu.memory_space<vmem>>, %arg4: memref<2x8x32xf32, #tpu.memory_space<vmem>>) attributes {dimension_semantics = [#tpu.dimension_semantics<parallel>], iteration_bounds = array<i64: 1>, scalar_prefetch = 0 : i64, scratch_operands = 0 : i64, tpu.core_type = #tpu.core_type<tc>, window_params = [{transform_indices = @transform_0, window_bounds = array<i64: 2, 8, 32>}, {pipeline_mode = #tpu.pipeline_mode<synchronous>, transform_indices = @transform_1, window_bounds = array<i64: 1, 1, 32>}, {pipeline_mode = #tpu.pipeline_mode<synchronous>, transform_indices = @transform_2, window_bounds = array<i64: 1, 1, 32>}, {transform_indices = @transform_3, window_bounds = array<i64: 2, 8, 32>}]} {
    %c0 = arith.constant 0 : index
    %c0_0 = arith.constant 0 : index
    %c0_1 = arith.constant 0 : index
    %0 = vector.load %arg1[%c0, %c0_0, %c0_1] : memref<2x8x32xf32, #tpu.memory_space<vmem>>, vector<2x8x32xf32>
    %c0_2 = arith.constant 0 : index
    %c0_3 = arith.constant 0 : index
    %c0_4 = arith.constant 0 : index
    %1 = vector.load %arg2[%c0_2, %c0_3, %c0_4] : memref<1x1x32xf32, #tpu.memory_space<vmem>>, vector<1x1x32xf32>
    %2 = vector.broadcast %1 : vector<1x1x32xf32> to vector<2x8x32xf32>
    %3 = arith.mulf %0, %2 : vector<2x8x32xf32>
    %c0_5 = arith.constant 0 : index
    %c0_6 = arith.constant 0 : index
    %c0_7 = arith.constant 0 : index
    %4 = vector.load %arg3[%c0_5, %c0_6, %c0_7] : memref<1x1x32xf32, #tpu.memory_space<vmem>>, vector<1x1x32xf32>
    %5 = vector.broadcast %4 : vector<1x1x32xf32> to vector<2x8x32xf32>
    %6 = arith.addf %3, %5 : vector<2x8x32xf32>
    %c0_8 = arith.constant 0 : index
    %c0_9 = arith.constant 0 : index
    %c0_10 = arith.constant 0 : index
    %7 = vector.load %arg4[%c0_8, %c0_9, %c0_10] : memref<2x8x32xf32, #tpu.memory_space<vmem>>, vector<2x8x32xf32>
    tpu.vector_store %arg4[%c0_8, %c0_9, %c0_10], %6 {strides = array<i32>} : memref<2x8x32xf32, #tpu.memory_space<vmem>>, vector<2x8x32xf32>,
    return
  }
  func.func @transform_0(%arg0: i32) -> (i32, i32, i32) {
    %c0_i32 = arith.constant 0 : i32
    %c0_i32_0 = arith.constant 0 : i32
    %c0_i32_1 = arith.constant 0 : i32
    return %arg0, %c0_i32, %c0_i32_0 : i32, i32, i32
  }
  func.func @transform_1(%arg0: i32) -> (i32, i32, i32) {
    %c0_i32 = arith.constant 0 : i32
    %c0_i32_0 = arith.constant 0 : i32
    %c0_i32_1 = arith.constant 0 : i32
    %c0_i32_2 = arith.constant 0 : i32
    return %c0_i32, %c0_i32_0, %c0_i32_1 : i32, i32, i32
  }
  func.func @transform_2(%arg0: i32) -> (i32, i32, i32) {
    %c0_i32 = arith.constant 0 : i32
    %c0_i32_0 = arith.constant 0 : i32
    %c0_i32_1 = arith.constant 0 : i32
    %c0_i32_2 = arith.constant 0 : i32
    return %c0_i32, %c0_i32_0, %c0_i32_1 : i32, i32, i32
  }
  func.func @transform_3(%arg0: i32) -> (i32, i32, i32) {
    %c0_i32 = arith.constant 0 : i32
    %c0_i32_0 = arith.constant 0 : i32
    %c0_i32_1 = arith.constant 0 : i32
    return %arg0, %c0_i32, %c0_i32_0 : i32, i32, i32
  }
}

module attributes {stable_mosaic.version = 11 : i64} {
  func.func @fused_ax_linear_stats_kernel(%arg0: i32, %arg1: i32, %arg2: memref<2x8x8xf32, #tpu.memory_space<vmem>>, %arg3: memref<2x8x16xf32, #tpu.memory_space<vmem>>, %arg4: memref<16x32xbf16, #tpu.memory_space<vmem>>, %arg5: memref<2x8x32xf32, #tpu.memory_space<vmem>>, %arg6: memref<1x32xf32, #tpu.memory_space<vmem>>, %arg7: memref<1x32xf32, #tpu.memory_space<vmem>>) attributes {dimension_semantics = [#tpu.dimension_semantics<parallel>, #tpu.dimension_semantics<arbitrary>], iteration_bounds = array<i64: 1, 1>, scalar_prefetch = 0 : i64, scratch_operands = 0 : i64, tpu.core_type = #tpu.core_type<tc>, window_params = [{transform_indices = @transform_0, window_bounds = array<i64: 2, 8, 8>}, {transform_indices = @transform_1, window_bounds = array<i64: 2, 8, 16>}, {transform_indices = @transform_2, window_bounds = array<i64: 16, 32>}, {transform_indices = @transform_3, window_bounds = array<i64: 2, 8, 32>}, {transform_indices = @transform_4, window_bounds = array<i64: 1, 32>}, {transform_indices = @transform_5, window_bounds = array<i64: 1, 32>}]} {
    %c0_i32 = arith.constant 0 : i32
    %0 = arith.cmpi eq, %arg1, %c0_i32 : i32
    %1 = arith.extui %0 : i1 to i32
    %c0_i32_0 = arith.constant 0 : i32
    %2 = arith.cmpi ne, %1, %c0_i32_0 : i32
    scf.if %2 {
      %cst_21 = arith.constant 0.000000e+00 : f32
      %69 = vector.broadcast %cst_21 : f32 to vector<1x32xf32>
      %c0_22 = arith.constant 0 : index
      %c0_23 = arith.constant 0 : index
      %70 = vector.load %arg6[%c0_22, %c0_23] : memref<1x32xf32, #tpu.memory_space<vmem>>, vector<1x32xf32>
      tpu.vector_store %arg6[%c0_22, %c0_23], %69 {strides = array<i32>} : memref<1x32xf32, #tpu.memory_space<vmem>>, vector<1x32xf32>,
      %cst_24 = arith.constant 0.000000e+00 : f32
      %71 = vector.broadcast %cst_24 : f32 to vector<1x32xf32>
      %c0_25 = arith.constant 0 : index
      %c0_26 = arith.constant 0 : index
      %72 = vector.load %arg7[%c0_25, %c0_26] : memref<1x32xf32, #tpu.memory_space<vmem>>, vector<1x32xf32>
      tpu.vector_store %arg7[%c0_25, %c0_26], %71 {strides = array<i32>} : memref<1x32xf32, #tpu.memory_space<vmem>>, vector<1x32xf32>,
    } else {
    }
    %c0 = arith.constant 0 : index
    %c0_1 = arith.constant 0 : index
    %c0_2 = arith.constant 0 : index
    %3 = vector.load %arg2[%c0, %c0_1, %c0_2] : memref<2x8x8xf32, #tpu.memory_space<vmem>>, vector<2x8x8xf32>
    %c0_3 = arith.constant 0 : index
    %c0_4 = arith.constant 0 : index
    %c0_5 = arith.constant 0 : index
    %4 = vector.load %arg3[%c0_3, %c0_4, %c0_5] : memref<2x8x16xf32, #tpu.memory_space<vmem>>, vector<2x8x16xf32>
    %5 = vector.extract_strided_slice %3 {offsets = [0, 0, 0], sizes = [2, 8, 1], strides = [1, 1, 1]} : vector<2x8x8xf32> to vector<2x8x1xf32>
    %6 = vector.extract_strided_slice %4 {offsets = [0, 0, 0], sizes = [2, 1, 16], strides = [1, 1, 1]} : vector<2x8x16xf32> to vector<2x1x16xf32>
    %7 = vector.broadcast %5 : vector<2x8x1xf32> to vector<2x8x16xf32>
    %8 = vector.broadcast %6 : vector<2x1x16xf32> to vector<2x8x16xf32>
    %9 = arith.mulf %7, %8 : vector<2x8x16xf32>
    %10 = vector.extract_strided_slice %3 {offsets = [0, 0, 1], sizes = [2, 8, 1], strides = [1, 1, 1]} : vector<2x8x8xf32> to vector<2x8x1xf32>
    %11 = vector.extract_strided_slice %4 {offsets = [0, 1, 0], sizes = [2, 1, 16], strides = [1, 1, 1]} : vector<2x8x16xf32> to vector<2x1x16xf32>
    %12 = vector.broadcast %10 : vector<2x8x1xf32> to vector<2x8x16xf32>
    %13 = vector.broadcast %11 : vector<2x1x16xf32> to vector<2x8x16xf32>
    %14 = arith.mulf %12, %13 : vector<2x8x16xf32>
    %15 = arith.addf %9, %14 : vector<2x8x16xf32>
    %16 = vector.extract_strided_slice %3 {offsets = [0, 0, 2], sizes = [2, 8, 1], strides = [1, 1, 1]} : vector<2x8x8xf32> to vector<2x8x1xf32>
    %17 = vector.extract_strided_slice %4 {offsets = [0, 2, 0], sizes = [2, 1, 16], strides = [1, 1, 1]} : vector<2x8x16xf32> to vector<2x1x16xf32>
    %18 = vector.broadcast %16 : vector<2x8x1xf32> to vector<2x8x16xf32>
    %19 = vector.broadcast %17 : vector<2x1x16xf32> to vector<2x8x16xf32>
    %20 = arith.mulf %18, %19 : vector<2x8x16xf32>
    %21 = arith.addf %15, %20 : vector<2x8x16xf32>
    %22 = vector.extract_strided_slice %3 {offsets = [0, 0, 3], sizes = [2, 8, 1], strides = [1, 1, 1]} : vector<2x8x8xf32> to vector<2x8x1xf32>
    %23 = vector.extract_strided_slice %4 {offsets = [0, 3, 0], sizes = [2, 1, 16], strides = [1, 1, 1]} : vector<2x8x16xf32> to vector<2x1x16xf32>
    %24 = vector.broadcast %22 : vector<2x8x1xf32> to vector<2x8x16xf32>
    %25 = vector.broadcast %23 : vector<2x1x16xf32> to vector<2x8x16xf32>
    %26 = arith.mulf %24, %25 : vector<2x8x16xf32>
    %27 = arith.addf %21, %26 : vector<2x8x16xf32>
    %28 = vector.extract_strided_slice %3 {offsets = [0, 0, 4], sizes = [2, 8, 1], strides = [1, 1, 1]} : vector<2x8x8xf32> to vector<2x8x1xf32>
    %29 = vector.extract_strided_slice %4 {offsets = [0, 4, 0], sizes = [2, 1, 16], strides = [1, 1, 1]} : vector<2x8x16xf32> to vector<2x1x16xf32>
    %30 = vector.broadcast %28 : vector<2x8x1xf32> to vector<2x8x16xf32>
    %31 = vector.broadcast %29 : vector<2x1x16xf32> to vector<2x8x16xf32>
    %32 = arith.mulf %30, %31 : vector<2x8x16xf32>
    %33 = arith.addf %27, %32 : vector<2x8x16xf32>
    %34 = vector.extract_strided_slice %3 {offsets = [0, 0, 5], sizes = [2, 8, 1], strides = [1, 1, 1]} : vector<2x8x8xf32> to vector<2x8x1xf32>
    %35 = vector.extract_strided_slice %4 {offsets = [0, 5, 0], sizes = [2, 1, 16], strides = [1, 1, 1]} : vector<2x8x16xf32> to vector<2x1x16xf32>
    %36 = vector.broadcast %34 : vector<2x8x1xf32> to vector<2x8x16xf32>
    %37 = vector.broadcast %35 : vector<2x1x16xf32> to vector<2x8x16xf32>
    %38 = arith.mulf %36, %37 : vector<2x8x16xf32>
    %39 = arith.addf %33, %38 : vector<2x8x16xf32>
    %40 = vector.extract_strided_slice %3 {offsets = [0, 0, 6], sizes = [2, 8, 1], strides = [1, 1, 1]} : vector<2x8x8xf32> to vector<2x8x1xf32>
    %41 = vector.extract_strided_slice %4 {offsets = [0, 6, 0], sizes = [2, 1, 16], strides = [1, 1, 1]} : vector<2x8x16xf32> to vector<2x1x16xf32>
    %42 = vector.broadcast %40 : vector<2x8x1xf32> to vector<2x8x16xf32>
    %43 = vector.broadcast %41 : vector<2x1x16xf32> to vector<2x8x16xf32>
    %44 = arith.mulf %42, %43 : vector<2x8x16xf32>
    %45 = arith.addf %39, %44 : vector<2x8x16xf32>
    %46 = vector.extract_strided_slice %3 {offsets = [0, 0, 7], sizes = [2, 8, 1], strides = [1, 1, 1]} : vector<2x8x8xf32> to vector<2x8x1xf32>
    %47 = vector.extract_strided_slice %4 {offsets = [0, 7, 0], sizes = [2, 1, 16], strides = [1, 1, 1]} : vector<2x8x16xf32> to vector<2x1x16xf32>
    %48 = vector.broadcast %46 : vector<2x8x1xf32> to vector<2x8x16xf32>
    %49 = vector.broadcast %47 : vector<2x1x16xf32> to vector<2x8x16xf32>
    %50 = arith.mulf %48, %49 : vector<2x8x16xf32>
    %51 = arith.addf %45, %50 : vector<2x8x16xf32>
    %52 = vector.shape_cast %51 : vector<2x8x16xf32> to vector<16x16xf32>
    %53 = arith.truncf %52 : vector<16x16xf32> to vector<16x16xbf16>
    %c0_6 = arith.constant 0 : index
    %c0_7 = arith.constant 0 : index
    %54 = vector.load %arg4[%c0_6, %c0_7] : memref<16x32xbf16, #tpu.memory_space<vmem>>, vector<16x32xbf16>
    %cst = arith.constant dense<0.000000e+00> : vector<16x32xf32>
    %55 = tpu.matmul %53, %54, %cst {dimension_numbers = #tpu.dot_dimension_numbers<[1], [0], [0], [1], [0, 0, 1, 1], [], []>} : vector<16x16xbf16>, vector<16x32xbf16>, vector<16x32xf32> -> vector<16x32xf32>
    %56 = vector.shape_cast %55 : vector<16x32xf32> to vector<2x8x32xf32>
    %c0_8 = arith.constant 0 : index
    %c0_9 = arith.constant 0 : index
    %c0_10 = arith.constant 0 : index
    %57 = vector.load %arg5[%c0_8, %c0_9, %c0_10] : memref<2x8x32xf32, #tpu.memory_space<vmem>>, vector<2x8x32xf32>
    tpu.vector_store %arg5[%c0_8, %c0_9, %c0_10], %56 {strides = array<i32>} : memref<2x8x32xf32, #tpu.memory_space<vmem>>, vector<2x8x32xf32>,
    %c0_11 = arith.constant 0 : index
    %c0_12 = arith.constant 0 : index
    %58 = vector.load %arg6[%c0_11, %c0_12] : memref<1x32xf32, #tpu.memory_space<vmem>>, vector<1x32xf32>
    %cst_13 = arith.constant dense<0.000000e+00> : vector<32xf32>
    %59 = vector.multi_reduction <add>, %55, %cst_13 [0] : vector<16x32xf32> to vector<32xf32>
    %60 = vector.shape_cast %59 : vector<32xf32> to vector<1x32xf32>
    %61 = arith.addf %58, %60 : vector<1x32xf32>
    %c0_14 = arith.constant 0 : index
    %c0_15 = arith.constant 0 : index
    %62 = vector.load %arg6[%c0_14, %c0_15] : memref<1x32xf32, #tpu.memory_space<vmem>>, vector<1x32xf32>
    tpu.vector_store %arg6[%c0_14, %c0_15], %61 {strides = array<i32>} : memref<1x32xf32, #tpu.memory_space<vmem>>, vector<1x32xf32>,
    %c0_16 = arith.constant 0 : index
    %c0_17 = arith.constant 0 : index
    %63 = vector.load %arg7[%c0_16, %c0_17] : memref<1x32xf32, #tpu.memory_space<vmem>>, vector<1x32xf32>
    %64 = arith.mulf %55, %55 : vector<16x32xf32>
    %cst_18 = arith.constant dense<0.000000e+00> : vector<32xf32>
    %65 = vector.multi_reduction <add>, %64, %cst_18 [0] : vector<16x32xf32> to vector<32xf32>
    %66 = vector.shape_cast %65 : vector<32xf32> to vector<1x32xf32>
    %67 = arith.addf %63, %66 : vector<1x32xf32>
    %c0_19 = arith.constant 0 : index
    %c0_20 = arith.constant 0 : index
    %68 = vector.load %arg7[%c0_19, %c0_20] : memref<1x32xf32, #tpu.memory_space<vmem>>, vector<1x32xf32>
    tpu.vector_store %arg7[%c0_19, %c0_20], %67 {strides = array<i32>} : memref<1x32xf32, #tpu.memory_space<vmem>>, vector<1x32xf32>,
    return
  }
  func.func @transform_0(%arg0: i32, %arg1: i32) -> (i32, i32, i32) {
    %c0_i32 = arith.constant 0 : i32
    %c0_i32_0 = arith.constant 0 : i32
    %c0_i32_1 = arith.constant 0 : i32
    return %arg1, %c0_i32, %c0_i32_0 : i32, i32, i32
  }
  func.func @transform_1(%arg0: i32, %arg1: i32) -> (i32, i32, i32) {
    %c0_i32 = arith.constant 0 : i32
    %c0_i32_0 = arith.constant 0 : i32
    %c0_i32_1 = arith.constant 0 : i32
    return %arg1, %c0_i32, %c0_i32_0 : i32, i32, i32
  }
  func.func @transform_2(%arg0: i32, %arg1: i32) -> (i32, i32) {
    %c0_i32 = arith.constant 0 : i32
    %c0_i32_0 = arith.constant 0 : i32
    return %c0_i32, %arg0 : i32, i32
  }
  func.func @transform_3(%arg0: i32, %arg1: i32) -> (i32, i32, i32) {
    %c0_i32 = arith.constant 0 : i32
    %c0_i32_0 = arith.constant 0 : i32
    return %arg1, %c0_i32, %arg0 : i32, i32, i32
  }
  func.func @transform_4(%arg0: i32, %arg1: i32) -> (i32, i32) {
    %c0_i32 = arith.constant 0 : i32
    %c0_i32_0 = arith.constant 0 : i32
    return %c0_i32, %arg0 : i32, i32
  }
  func.func @transform_5(%arg0: i32, %arg1: i32) -> (i32, i32) {
    %c0_i32 = arith.constant 0 : i32
    %c0_i32_0 = arith.constant 0 : i32
    return %c0_i32, %arg0 : i32, i32
  }
}

</mosaic_0001>

<llo_original>
// kernel: gconv_forward.3
$region0: #{gconv_forward.3}
  #allocation0 [shape = 'u32[]', space=smem, size = 0x4, offset = 0x4, fixed_abs, tag = 'smem constant byte address 0x4 - core index']
  #allocation1 [shape = 'u32[72,128]{1,0:T(1,128)}', space=vmem, size = 0x9000, scoped, tag = 'internal scratch']
  %s0 = inlined_call_operand.hbm [shape: f32[2,8,32], index: 0, kind: input, shape index: {}, may-alias: {0,3}]
  %s1 = inlined_call_operand.vmem [shape: f32[1,1,32], index: 1, kind: input, shape index: {}]
  %s2 = inlined_call_operand.vmem [shape: f32[1,1,32], index: 2, kind: input, shape index: {}]
  %s3 = inlined_call_operand.hbm [shape: f32[2,8,32], index: 3, kind: output, shape index: {}, may-alias: {0,3}]
  %s4 = sld [smem:[#allocation0]]
  $region26: #{gconv_forward.3} parent=0
    _
  %s6 = ssub.s32 1, %s4
  %s7 = scalar_select 0, %s6, %s4
  $region1: #{gconv_forward.3} parent=0
    #allocation2 [shape = 'u8[8192]{0}', space=vmem, size = 0x2000, scoped, tag = 'input window, operand 0, single buffered']
    #allocation3 [shape = 's32[1]{0}', space=sflag, size = 0x4, scoped, tag = 'scoped memory for gconv_forward.3']
    #allocation4 [shape = 's32[1]{0}', space=sflag, size = 0x4, scoped, tag = 'scoped memory for gconv_forward.3']
    #allocation5 [shape = 'u8[8192]{0}', space=vmem, size = 0x2000, scoped, tag = 'output window, operand 0, single buffered']
    %8 = vsyncpa [#allocation3], 0
    %9 = vsyncpa [#allocation4], 0
    // Predicated region
    $region2: #{gconv_forward.3} parent=1 // pred_check
      _
    $region3: #{gconv_forward.3} parent=1 // pred_check_branch
      %11 = sbr.rel (0) target = $region5
    $region4: #{gconv_forward.3} parent=1 // pred_region
      %13 = vsyncadd [#allocation3], 0
      %s14 = sshll.u32 %s0, 4
      %s15 = int_to_ptr.hbm [resolvable:$true] %s14
      %s16 = sshll.u32 [#allocation2], 4
      %s17 = int_to_ptr.vmem [resolvable:$true] %s16
      %22 = dma.hbm_to_vmem [thread:$0]  %s15, 256, %s17, [#allocation3], 128, 128, 8
    $region5: #{gconv_forward.3} parent=1 // pred_fallthru
      _
    // Predicated region
    $region6: #{gconv_forward.3} parent=1 // pred_check
      _
    $region7: #{gconv_forward.3} parent=1 // pred_check_branch
      %24 = sbr.rel (0) target = $region9
    $region8: #{gconv_forward.3} parent=1 // pred_region
      _
    $region9: #{gconv_forward.3} parent=1 // pred_fallthru
      _
    // Predicated region
    $region10: #{gconv_forward.3} parent=1 // pred_check
      _
    $region11: #{gconv_forward.3} parent=1 // pred_check_branch
      %26 = sbr.rel (0) target = $region13
    $region12: #{gconv_forward.3} parent=1 // pred_region
      _
    $region13: #{gconv_forward.3} parent=1 // pred_fallthru
      _
    // Predicated region
    $region14: #{gconv_forward.3} parent=1 // pred_check
      _
    $region15: #{gconv_forward.3} parent=1 // pred_check_branch
      %28 = sbr.rel (0) target = $region17
    $region16: #{gconv_forward.3} parent=1 // pred_region
      %30 = dma.done [#allocation3], 256
    $region17: #{gconv_forward.3} parent=1 // pred_fallthru
      _
    %v31 = vld [vmem:[#allocation2] sm:$0xff]
    %v32 = vld [vmem:[#allocation2 + $0x8] sm:$0xff]
    %v33 = vld [vmem:[%s1] sm:$0x1]
    %v35 = vperm.slane %v33, 0
    %v37 = vmul.f32 %v31, %v35
    %v38 = vmul.f32 %v32, %v35
    %v39 = vld [vmem:[%s2] sm:$0x1]
    %v41 = vperm.slane %v39, 0
    %v43 = vadd.f32 %v37, %v41
    %v44 = vadd.f32 %v38, %v41
    %vm45 = vcmask 261120
    %46 = vst.msk [vmem:[#allocation5] sm:$0xff] %vm45, %v43
    %47 = vst.msk [vmem:[#allocation5 + $0x8] sm:$0xff] %vm45, %v44
    // Predicated region
    $region18: #{gconv_forward.3} parent=1 // pred_check
      _
    $region19: #{gconv_forward.3} parent=1 // pred_check_branch
      %49 = sbr.rel (0) target = $region21
    $region20: #{gconv_forward.3} parent=1 // pred_region
      %51 = vsyncadd [#allocation4], 0
      %s52 = sshll.u32 [#allocation5], 4
      %s53 = int_to_ptr.vmem [resolvable:$true] %s52
      %s54 = sshll.u32 %s3, 4
      %s55 = int_to_ptr.hbm [resolvable:$true] %s54
      %60 = dma.vmem_to_hbm [thread:$0]  %s53, 256, %s55, [#allocation4], 128, 128, 8
    $region21: #{gconv_forward.3} parent=1 // pred_fallthru
      _
    // Predicated region
    $region22: #{gconv_forward.3} parent=1 // pred_check
      _
    $region23: #{gconv_forward.3} parent=1 // pred_check_branch
      %62 = sbr.rel (0) target = $region25
    $region24: #{gconv_forward.3} parent=1 // pred_region
      %64 = dma.done [#allocation4], 256
    $region25: #{gconv_forward.3} parent=1 // pred_fallthru
      _
    %65 = vsyncpa [#allocation3], 1
    %66 = vsyncpa [#allocation4], 1

// kernel: gconv_forward.2
$region0: #{gconv_forward.2}
  #allocation0 [shape = 'u32[]', space=smem, size = 0x4, offset = 0x4, fixed_abs, tag = 'smem constant byte address 0x4 - core index']
  #allocation1 [shape = 'u32[72,128]{1,0:T(1,128)}', space=vmem, size = 0x9000, scoped, tag = 'internal scratch']
  %s0 = inlined_call_operand.vmem [shape: f32[2,8,8], index: 0, kind: input, shape index: {}]
  %s1 = inlined_call_operand.hbm [shape: f32[2,8,16], index: 1, kind: input, shape index: {}]
  %s2 = inlined_call_operand.vmem [shape: bf16[16,32], index: 2, kind: input, shape index: {}]
  %s3 = inlined_call_operand.hbm [shape: f32[2,8,32], index: 3, kind: output, shape index: {0}]
  %s4 = inlined_call_operand.vmem [shape: f32[1,32], index: 4, kind: output, shape index: {1}]
  %s5 = inlined_call_operand.vmem [shape: f32[1,32], index: 5, kind: output, shape index: {2}]
  %6 = xla_tuple %s3, %s4, %s5
  %s7 = sld [smem:[#allocation0]]
  $region46: #{gconv_forward.2} parent=0
    _
  %s9 = ssub.s32 1, %s7
  %s10 = scalar_select 0, %s9, %s7
  $region1: #{gconv_forward.2} parent=0
    #allocation2 [shape = 'u8[8192]{0}', space=vmem, size = 0x2000, scoped, tag = 'input window, operand 1, single buffered']
    #allocation3 [shape = 's32[1]{0}', space=sflag, size = 0x4, scoped, tag = 'scoped memory for gconv_forward.2']
    #allocation4 [shape = 's32[1]{0}', space=sflag, size = 0x4, scoped, tag = 'scoped memory for gconv_forward.2']
    #allocation5 [shape = 'u8[8192]{0}', space=vmem, size = 0x2000, scoped, tag = 'output window, operand 0, single buffered']
    %11 = vsyncpa [#allocation3], 0
    %12 = vsyncpa [#allocation4], 0
    // Predicated region
    $region2: #{gconv_forward.2} parent=1 // pred_check
      _
    $region3: #{gconv_forward.2} parent=1 // pred_check_branch
      %14 = sbr.rel (0) target = $region5
    $region4: #{gconv_forward.2} parent=1 // pred_region
      _
    $region5: #{gconv_forward.2} parent=1 // pred_fallthru
      _
    // Predicated region
    $region6: #{gconv_forward.2} parent=1 // pred_check
      _
    $region7: #{gconv_forward.2} parent=1 // pred_check_branch
      %16 = sbr.rel (0) target = $region9
    $region8: #{gconv_forward.2} parent=1 // pred_region
      %18 = vsyncadd [#allocation3], 0
      %s19 = sshll.u32 %s1, 4
      %s20 = int_to_ptr.hbm [resolvable:$true] %s19
      %s21 = sshll.u32 [#allocation2], 4
      %s22 = int_to_ptr.vmem [resolvable:$true] %s21
      %27 = dma.hbm_to_vmem [thread:$0]  %s20, 256, %s22, [#allocation3], 128, 128, 8
    $region9: #{gconv_forward.2} parent=1 // pred_fallthru
      _
    // Predicated region
    $region10: #{gconv_forward.2} parent=1 // pred_check
      _
    $region11: #{gconv_forward.2} parent=1 // pred_check_branch
      %29 = sbr.rel (0) target = $region13
    $region12: #{gconv_forward.2} parent=1 // pred_region
      _
    $region13: #{gconv_forward.2} parent=1 // pred_fallthru
      _
    // Predicated region
    $region14: #{gconv_forward.2} parent=1 // pred_check
      _
    $region15: #{gconv_forward.2} parent=1 // pred_check_branch
      %31 = sbr.rel (0) target = $region17
    $region16: #{gconv_forward.2} parent=1 // pred_region
      %33 = dma.done [#allocation3], 256
    $region17: #{gconv_forward.2} parent=1 // pred_fallthru
      _
    %p35 = scmp.eq.s32.totalorder 0, 0
    // Predicated region
    $region18: #{gconv_forward.2} parent=1 // pred_check
      %p36 = pneg %p35
    $region19: #{gconv_forward.2} parent=1 // pred_check_branch
      %38 = sbr.rel (%p36) target = $region21
    $region20: #{gconv_forward.2} parent=1 // pred_region
      %vm39 = vcmask 253952
      %40 = vst.msk [vmem:[%s4] sm:$0x1] %vm39, 0.0
      %41 = vst.msk [vmem:[%s5] sm:$0x1] %vm39, 0.0
    $region21: #{gconv_forward.2} parent=1 // pred_fallthru
      _
    %v42 = vld [vmem:[%s0] sm:$0xff]
    %v43 = vld [vmem:[%s0 + $0x8] sm:$0xff]
    %v44 = vld [vmem:[#allocation2] sm:$0xff]
    %v45 = vld [vmem:[#allocation2 + $0x8] sm:$0xff]
    %47 = vset.pattern.permute.xlu0 0
    %48 = vperm.xlu0 %47, %v42
    %v49 = vpop.permute.xlu0 %48
    %52 = vset.pattern.permute.xlu0 0
    %53 = vperm.xlu0 %52, %v43
    %v54 = vpop.permute.xlu0 %53
    %v56 = vperm.slane %v44, 0
    %v57 = vperm.slane %v45, 0
    %v58 = vmul.f32 %v49, %v56
    %v59 = vmul.f32 %v54, %v57
    %60 = vset.pattern.permute.xlu0 1
    %61 = vperm.xlu0 %60, %v42
    %v62 = vpop.permute.xlu0 %61
    %64 = vset.pattern.permute.xlu0 1
    %65 = vperm.xlu0 %64, %v43
    %v66 = vpop.permute.xlu0 %65
    %v68 = vperm.slane %v44, 1
    %v69 = vperm.slane %v45, 1
    %v70 = vmul.f32 %v62, %v68
    %v71 = vmul.f32 %v66, %v69
    %v72 = vadd.f32 %v58, %v70
    %v73 = vadd.f32 %v59, %v71
    %74 = vset.pattern.permute.xlu0 2
    %75 = vperm.xlu0 %74, %v42
    %v76 = vpop.permute.xlu0 %75
    %78 = vset.pattern.permute.xlu0 2
    %79 = vperm.xlu0 %78, %v43
    %v80 = vpop.permute.xlu0 %79
    %v82 = vperm.slane %v44, 2
    %v83 = vperm.slane %v45, 2
    %v84 = vmul.f32 %v76, %v82
    %v85 = vmul.f32 %v80, %v83
    %v86 = vadd.f32 %v72, %v84
    %v87 = vadd.f32 %v73, %v85
    %88 = vset.pattern.permute.xlu0 3
    %89 = vperm.xlu0 %88, %v42
    %v90 = vpop.permute.xlu0 %89
    %92 = vset.pattern.permute.xlu0 3
    %93 = vperm.xlu0 %92, %v43
    %v94 = vpop.permute.xlu0 %93
    %v96 = vperm.slane %v44, 3
    %v97 = vperm.slane %v45, 3
    %v98 = vmul.f32 %v90, %v96
    %v99 = vmul.f32 %v94, %v97
    %v100 = vadd.f32 %v86, %v98
    %v101 = vadd.f32 %v87, %v99
    %102 = vset.pattern.permute.xlu0 4
    %103 = vperm.xlu0 %102, %v42
    %v104 = vpop.permute.xlu0 %103
    %106 = vset.pattern.permute.xlu0 4
    %107 = vperm.xlu0 %106, %v43
    %v108 = vpop.permute.xlu0 %107
    %v110 = vperm.slane %v44, 4
    %v111 = vperm.slane %v45, 4
    %v112 = vmul.f32 %v104, %v110
    %v113 = vmul.f32 %v108, %v111
    %v114 = vadd.f32 %v100, %v112
    %v115 = vadd.f32 %v101, %v113
    %116 = vset.pattern.permute.xlu0 5
    %117 = vperm.xlu0 %116, %v42
    %v118 = vpop.permute.xlu0 %117
    %120 = vset.pattern.permute.xlu0 5
    %121 = vperm.xlu0 %120, %v43
    %v122 = vpop.permute.xlu0 %121
    %v124 = vperm.slane %v44, 5
    %v125 = vperm.slane %v45, 5
    %v126 = vmul.f32 %v118, %v124
    %v127 = vmul.f32 %v122, %v125
    %v128 = vadd.f32 %v114, %v126
    %v129 = vadd.f32 %v115, %v127
    %130 = vset.pattern.permute.xlu0 6
    %131 = vperm.xlu0 %130, %v42
    %v132 = vpop.permute.xlu0 %131
    %134 = vset.pattern.permute.xlu0 6
    %135 = vperm.xlu0 %134, %v43
    %v136 = vpop.permute.xlu0 %135
    %v138 = vperm.slane %v44, 6
    %v139 = vperm.slane %v45, 6
    %v140 = vmul.f32 %v132, %v138
    %v141 = vmul.f32 %v136, %v139
    %v142 = vadd.f32 %v128, %v140
    %v143 = vadd.f32 %v129, %v141
    %144 = vset.pattern.permute.xlu0 7
    %145 = vperm.xlu0 %144, %v42
    %v146 = vpop.permute.xlu0 %145
    %148 = vset.pattern.permute.xlu0 7
    %149 = vperm.xlu0 %148, %v43
    %v150 = vpop.permute.xlu0 %149
    %v152 = vperm.slane %v44, 7
    %v153 = vperm.slane %v45, 7
    %v154 = vmul.f32 %v146, %v152
    %v155 = vmul.f32 %v150, %v153
    %v156 = vadd.f32 %v142, %v154
    %v157 = vadd.f32 %v143, %v155
    %v158 = vpack.c.bf16 %v157, %v156
    %v159 = vld [vmem:[%s2] sm:$0xf]
    %v160 = vld [vmem:[%s2 + $0x4] sm:$0xf]
    %v163 = vunpack.c.l.b16 %v159
    %v164 = vunpack.c.l.b16 %v160
    %v165 = vpack.c.b16 %v164, %v163
    %vm167 = vcmask 130048
    %v169 = vsel %vm167, %v158, 0
    %171 = vmatpush.bf16.msra.mxu0 0
    %172 = vmatpush.bf16.msra.mxu0 0
    %173 = vmatpush.bf16.msra.mxu0 0
    %174 = vmatpush.bf16.msra.mxu0 0
    %175 = vmatpush.bf16.msra.mxu0 0
    %176 = vmatpush.bf16.msra.mxu0 0
    %177 = vmatpush.bf16.msra.mxu0 0
    %178 = vmatpush.bf16.msra.mxu0 %v165
    %179 = vmatmul.bf16.gmra.mxu0 %v169
    %v180 = vpop.f32.mrf.mxu0
    %v181 = vadd.f32 0.0, %v180
    %v182 = vpop.f32.mrf.mxu0
    %v183 = vadd.f32 0.0, %v182
    %184 = vdwg.mxu0
    %vm185 = vcmask 261120
    %186 = vst.msk [vmem:[#allocation5] sm:$0xff] %vm185, %v181
    %187 = vst.msk [vmem:[#allocation5 + $0x8] sm:$0xff] %vm185, %v183
    %v188 = vld [vmem:[%s4] sm:$0x1]
    %v189 = vsel %vm185, %v181, 0.0
    %v190 = vsel %vm185, %v183, 0.0
    %v191 = vadd.f32 %v189, %v190
    %v192 = vrot.slane %v191, 4
    %v193 = vadd.f32 %v191, %v192
    %v194 = vrot.slane %v193, 2
    %v195 = vadd.f32 %v193, %v194
    %v196 = vrot.slane %v195, 1
    %v197 = vadd.f32 %v195, %v196
    %v198 = vadd.f32 %v188, %v197
    %vm199 = vcmask 253952
    %200 = vst.msk [vmem:[%s4] sm:$0x1] %vm199, %v198
    %v201 = vld [vmem:[%s5] sm:$0x1]
    %v202 = vmul.f32 %v181, %v181
    %v203 = vmul.f32 %v183, %v183
    %v204 = vsel %vm185, %v202, 0.0
    %v205 = vsel %vm185, %v203, 0.0
    %v206 = vadd.f32 %v204, %v205
    %v207 = vrot.slane %v206, 4
    %v208 = vadd.f32 %v206, %v207
    %v209 = vrot.slane %v208, 2
    %v210 = vadd.f32 %v208, %v209
    %v211 = vrot.slane %v210, 1
    %v212 = vadd.f32 %v210, %v211
    %v213 = vadd.f32 %v201, %v212
    %214 = vst.msk [vmem:[%s5] sm:$0x1] %vm199, %v213
    // Predicated region
    $region22: #{gconv_forward.2} parent=1 // pred_check
      _
    $region23: #{gconv_forward.2} parent=1 // pred_check_branch
      %216 = sbr.rel (0) target = $region25
    $region24: #{gconv_forward.2} parent=1 // pred_region
      %218 = vsyncadd [#allocation4], 0
      %s219 = sshll.u32 [#allocation5], 4
      %s220 = int_to_ptr.vmem [resolvable:$true] %s219
      %s221 = sshll.u32 %s3, 4
      %s222 = int_to_ptr.hbm [resolvable:$true] %s221
      %227 = dma.vmem_to_hbm [thread:$0]  %s220, 256, %s222, [#allocation4], 128, 128, 8
    $region25: #{gconv_forward.2} parent=1 // pred_fallthru
      _
    // Predicated region
    $region26: #{gconv_forward.2} parent=1 // pred_check
      _
    $region27: #{gconv_forward.2} parent=1 // pred_check_branch
      %229 = sbr.rel (0) target = $region29
    $region28: #{gconv_forward.2} parent=1 // pred_region
      _
    $region29: #{gconv_forward.2} parent=1 // pred_fallthru
      _
    // Predicated region
    $region30: #{gconv_forward.2} parent=1 // pred_check
      _
    $region31: #{gconv_forward.2} parent=1 // pred_check_branch
      %231 = sbr.rel (0) target = $region33
    $region32: #{gconv_forward.2} parent=1 // pred_region
      _
    $region33: #{gconv_forward.2} parent=1 // pred_fallthru
      _
    // Predicated region
    $region34: #{gconv_forward.2} parent=1 // pred_check
      _
    $region35: #{gconv_forward.2} parent=1 // pred_check_branch
      %233 = sbr.rel (0) target = $region37
    $region36: #{gconv_forward.2} parent=1 // pred_region
      %235 = dma.done [#allocation4], 256
    $region37: #{gconv_forward.2} parent=1 // pred_fallthru
      _
    // Predicated region
    $region38: #{gconv_forward.2} parent=1 // pred_check
      _
    $region39: #{gconv_forward.2} parent=1 // pred_check_branch
      %237 = sbr.rel (0) target = $region41
    $region40: #{gconv_forward.2} parent=1 // pred_region
      _
    $region41: #{gconv_forward.2} parent=1 // pred_fallthru
      _
    // Predicated region
    $region42: #{gconv_forward.2} parent=1 // pred_check
      _
    $region43: #{gconv_forward.2} parent=1 // pred_check_branch
      %239 = sbr.rel (0) target = $region45
    $region44: #{gconv_forward.2} parent=1 // pred_region
      _
    $region45: #{gconv_forward.2} parent=1 // pred_fallthru
      _
    %240 = vsyncpa [#allocation3], 1
    %241 = vsyncpa [#allocation4], 1

</llo_original>
